<compile_context>
chip_gen: v5e
topology: v5e:2x2
jax: 0.10.0
libtpu: 0.0.40
codegen_flags: <defaults>
</compile_context>

<pallas_src>
import functools

import jax
import jax.numpy as jnp
from jax.experimental import pallas as pl
from jax.experimental.pallas import tpu as pltpu


def _round_up(x, m):
    return (x + m - 1) // m * m


def _mlp_kernel(*refs, n_layers):
    """Fused MLP over one batch tile.

    refs = (x_ref, w_0..w_{L-1}, b_0..b_{L-1}, o_ref)
      x_ref : [TB, P_0]       f32 input tile (zero-padded lanes)
      w_l   : [P_l, P_{l+1}]  bf16 padded weight (resident)
      b_l   : [1,  P_{l+1}]   f32  padded bias   (resident)
      o_ref : [TB, P_L]       f32 output tile (padded lanes end up exactly zero)
    """
    x_ref = refs[0]
    w_refs = refs[1:1 + n_layers]
    b_refs = refs[1 + n_layers:1 + 2 * n_layers]
    o_ref = refs[1 + 2 * n_layers]

    h = x_ref[...].astype(jnp.float32)
    for l in range(n_layers):                      # static, unrolled over layers
        y = jnp.dot(h.astype(jnp.bfloat16), w_refs[l][...],
                    preferred_element_type=jnp.float32)   # bf16 MXU, f32 accumulate
        y = y + b_refs[l][...]                             # f32 elementwise
        if l < n_layers - 1:
            h = jax.nn.sigmoid(y)                          # f32 on the EUP
        else:
            o_ref[...] = y.astype(o_ref.dtype)


def prepare_params(params):
    """One-time padding/conversion of (w, b) pairs (hoisted off the call path).

    Each layer is padded to its OWN 128-multiple in/out widths; zero-padded
    rows/cols make the padded lanes contribute exactly 0 downstream (so the
    math is exact up to the bf16 cast).  Weights -> bf16, biases stay f32.
    Returns (padded_weights, padded_biases, logical_out_features).
    """
    ws, bs = [], []
    for w, b in params:
        d_in, d_out = w.shape
        p_in, p_out = _round_up(d_in, 128), _round_up(d_out, 128)
        wp = jnp.zeros((p_in, p_out), jnp.bfloat16)
        wp = wp.at[:d_in, :d_out].set(w.astype(jnp.bfloat16))
        bp = jnp.zeros((1, p_out), jnp.float32).at[:, :d_out].set(b)
        ws.append(wp)
        bs.append(bp)
    return ws, bs, params[-1][0].shape[1]


def feedforward_nn(x, ws, bs, d_out, *, tile_b=None):
    """Forward pass equivalent to FeedforwardNN(sizes).forward(x).

    x: [B, Din] f32.  ws / bs / d_out come from prepare_params(params).
    """
    B, d_in = x.shape
    L = len(ws)
    p_in = ws[0].shape[0]       # padded input width
    p_out = ws[-1].shape[1]     # padded output width

    # Batch tile: whole (8-aligned) batch for small B -> single grid step;
    # capped at 512 for large B.  f32 activations -> sublane multiple of 8.
    if tile_b is None:
        tile_b = min(_round_up(B, 8), 512)
    tile_b = _round_up(tile_b, 8)
    Bp = _round_up(B, tile_b)

    # Zero-pad the input batch rows / lanes (padded lanes hit zero weight rows).
    xp = jnp.zeros((Bp, p_in), jnp.float32).at[:B, :d_in].set(
        x.astype(jnp.float32))

    # Scheduler hint counts the padded (actual) work.
    layer_dims = [(w.shape[0], w.shape[1]) for w in ws]
    cost = pl.CostEstimate(
        flops=2 * Bp * sum(pi * po for pi, po in layer_dims),
        transcendentals=Bp * sum(po for _, po in layer_dims[:-1]),
        bytes_accessed=(4 * Bp * (p_in + p_out)
                        + sum(int(w.size) * 2 for w in ws)
                        + sum(int(b.size) * 4 for b in bs)),
    )

    # Explicit VMEM budget: resident weights/biases (x2 for pipeliner buffers)
    # + double-buffered x/out tiles + headroom; capped at 64 MiB (v7x per-TC VMEM).
    w_bytes = (sum(int(w.size) * 2 for w in ws)
               + sum(int(b.size) * 4 for b in bs))
    io_bytes = 2 * tile_b * p_in * 4 + 2 * tile_b * p_out * 4
    vmem_limit = int(min(max(2 * w_bytes + io_bytes + (4 << 20), 32 << 20),
                         64 << 20))

    kernel = functools.partial(_mlp_kernel, n_layers=L)
    resident = lambda i: (0, 0)                     # constant block index
    out_p = pl.pallas_call(
        kernel,
        out_shape=jax.ShapeDtypeStruct((Bp, p_out), jnp.float32),
        grid=(Bp // tile_b,),
        in_specs=(
            [pl.BlockSpec((tile_b, p_in), lambda i: (i, 0))]     # x: batch-tiled
            + [pl.BlockSpec(w.shape, resident) for w in ws]      # weights resident
            + [pl.BlockSpec(b.shape, resident) for b in bs]      # biases resident
        ),
        out_specs=pl.BlockSpec((tile_b, p_out), lambda i: (i, 0)),
        compiler_params=pltpu.CompilerParams(
            dimension_semantics=("parallel",),
            vmem_limit_bytes=vmem_limit),
        cost_estimate=cost,
    )(xp, *ws, *bs)

    return out_p[:B, :d_out]


def init_params(sizes, key):
    """Deterministic init mimicking PyTorch nn.Linear default U(-1/sqrt(fan_in), +)."""
    params = []
    for i in range(len(sizes) - 1):
        fan_in, fan_out = sizes[i], sizes[i + 1]
        key, kw, kb = jax.random.split(key, 3)
        bound = 1.0 / jnp.sqrt(jnp.float32(fan_in))
        # Store weight as [in, out] (transpose of PyTorch's [out, in]).
        w = jax.random.uniform(kw, (fan_in, fan_out), jnp.float32, -bound, bound)
        b = jax.random.uniform(kb, (1, fan_out), jnp.float32, -bound, bound)
        params.append((w, b))
    return params


if __name__ == "__main__":
    key = jax.random.PRNGKey(0)
    key, kx = jax.random.split(key)

    # sizes consistent with the module: 16 -> 32 -> 32 -> 8, batch = 16
    sizes = [16, 32, 32, 8]
    batch = 16

    x = jax.random.normal(kx, (batch, sizes[0]), jnp.float32)
    params = init_params(sizes, key)

    # One-time padding / bf16 conversion (hoisted off the forward path).
    ws, bs, d_out = prepare_params(params)

    # Default tile_b -> whole batch -> grid=(1,).
    out = feedforward_nn(x, ws, bs, d_out)
    out = jax.block_until_ready(out)

    # Pure-JAX f32 reference (same math, no Pallas, no padding).
    ref = x
    for i, (w, b) in enumerate(params):
        ref = ref @ w + b
        if i < len(params) - 1:
            ref = jax.nn.sigmoid(ref)

    assert out.shape == (batch, sizes[-1])
    # bf16 matmul operands with f32 accumulation -> loosened tolerance.
    assert jnp.allclose(out, ref, atol=2e-2, rtol=2e-2)

    print("KERNEL_OK")
</pallas_src>

<mosaic_0001>
module attributes {stable_mosaic.version = 11 : i64} {
  func.func @_mlp_kernel(%arg0: i32, %arg1: memref<16x128xf32, #tpu.memory_space<vmem>>, %arg2: memref<128x128xbf16, #tpu.memory_space<vmem>>, %arg3: memref<128x128xbf16, #tpu.memory_space<vmem>>, %arg4: memref<128x128xbf16, #tpu.memory_space<vmem>>, %arg5: memref<1x128xf32, #tpu.memory_space<vmem>>, %arg6: memref<1x128xf32, #tpu.memory_space<vmem>>, %arg7: memref<1x128xf32, #tpu.memory_space<vmem>>, %arg8: memref<16x128xf32, #tpu.memory_space<vmem>>) attributes {dimension_semantics = [#tpu.dimension_semantics<parallel>], iteration_bounds = array<i64: 1>, scalar_prefetch = 0 : i64, scratch_operands = 0 : i64, tpu.core_type = #tpu.core_type<tc>, window_params = [{transform_indices = @transform_0, window_bounds = array<i64: 16, 128>}, {pipeline_mode = #tpu.pipeline_mode<synchronous>, transform_indices = @transform_1, window_bounds = array<i64: 128, 128>}, {pipeline_mode = #tpu.pipeline_mode<synchronous>, transform_indices = @transform_2, window_bounds = array<i64: 128, 128>}, {pipeline_mode = #tpu.pipeline_mode<synchronous>, transform_indices = @transform_3, window_bounds = array<i64: 128, 128>}, {pipeline_mode = #tpu.pipeline_mode<synchronous>, transform_indices = @transform_4, window_bounds = array<i64: 1, 128>}, {pipeline_mode = #tpu.pipeline_mode<synchronous>, transform_indices = @transform_5, window_bounds = array<i64: 1, 128>}, {pipeline_mode = #tpu.pipeline_mode<synchronous>, transform_indices = @transform_6, window_bounds = array<i64: 1, 128>}, {transform_indices = @transform_7, window_bounds = array<i64: 16, 128>}]} {
    %c0 = arith.constant 0 : index
    %c0_0 = arith.constant 0 : index
    %0 = vector.load %arg1[%c0, %c0_0] : memref<16x128xf32, #tpu.memory_space<vmem>>, vector<16x128xf32>
    %1 = arith.truncf %0 : vector<16x128xf32> to vector<16x128xbf16>
    %c0_1 = arith.constant 0 : index
    %c0_2 = arith.constant 0 : index
    %2 = vector.load %arg2[%c0_1, %c0_2] : memref<128x128xbf16, #tpu.memory_space<vmem>>, vector<128x128xbf16>
    %cst = arith.constant dense<0.000000e+00> : vector<16x128xf32>
    %3 = tpu.matmul %1, %2, %cst {dimension_numbers = #tpu.dot_dimension_numbers<[1], [0], [0], [1], [0, 0, 1, 1], [], []>} : vector<16x128xbf16>, vector<128x128xbf16>, vector<16x128xf32> -> vector<16x128xf32>
    %c0_3 = arith.constant 0 : index
    %c0_4 = arith.constant 0 : index
    %4 = vector.load %arg5[%c0_3, %c0_4] : memref<1x128xf32, #tpu.memory_space<vmem>>, vector<1x128xf32>
    %5 = vector.broadcast %4 : vector<1x128xf32> to vector<16x128xf32>
    %6 = arith.addf %3, %5 : vector<16x128xf32>
    %7 = arith.negf %6 : vector<16x128xf32>
    %8 = math.exp %7 : vector<16x128xf32>
    %cst_5 = arith.constant 1.000000e+00 : f32
    %9 = vector.broadcast %cst_5 : f32 to vector<16x128xf32>
    %10 = arith.addf %9, %8 : vector<16x128xf32>
    %11 = arith.divf %9, %10 : vector<16x128xf32>
    %12 = arith.truncf %11 : vector<16x128xf32> to vector<16x128xbf16>
    %c0_6 = arith.constant 0 : index
    %c0_7 = arith.constant 0 : index
    %13 = vector.load %arg3[%c0_6, %c0_7] : memref<128x128xbf16, #tpu.memory_space<vmem>>, vector<128x128xbf16>
    %cst_8 = arith.constant dense<0.000000e+00> : vector<16x128xf32>
    %14 = tpu.matmul %12, %13, %cst_8 {dimension_numbers = #tpu.dot_dimension_numbers<[1], [0], [0], [1], [0, 0, 1, 1], [], []>} : vector<16x128xbf16>, vector<128x128xbf16>, vector<16x128xf32> -> vector<16x128xf32>
    %c0_9 = arith.constant 0 : index
    %c0_10 = arith.constant 0 : index
    %15 = vector.load %arg6[%c0_9, %c0_10] : memref<1x128xf32, #tpu.memory_space<vmem>>, vector<1x128xf32>
    %16 = vector.broadcast %15 : vector<1x128xf32> to vector<16x128xf32>
    %17 = arith.addf %14, %16 : vector<16x128xf32>
    %18 = arith.negf %17 : vector<16x128xf32>
    %19 = math.exp %18 : vector<16x128xf32>
    %cst_11 = arith.constant 1.000000e+00 : f32
    %20 = vector.broadcast %cst_11 : f32 to vector<16x128xf32>
    %21 = arith.addf %20, %19 : vector<16x128xf32>
    %22 = arith.divf %20, %21 : vector<16x128xf32>
    %23 = arith.truncf %22 : vector<16x128xf32> to vector<16x128xbf16>
    %c0_12 = arith.constant 0 : index
    %c0_13 = arith.constant 0 : index
    %24 = vector.load %arg4[%c0_12, %c0_13] : memref<128x128xbf16, #tpu.memory_space<vmem>>, vector<128x128xbf16>
    %cst_14 = arith.constant dense<0.000000e+00> : vector<16x128xf32>
    %25 = tpu.matmul %23, %24, %cst_14 {dimension_numbers = #tpu.dot_dimension_numbers<[1], [0], [0], [1], [0, 0, 1, 1], [], []>} : vector<16x128xbf16>, vector<128x128xbf16>, vector<16x128xf32> -> vector<16x128xf32>
    %c0_15 = arith.constant 0 : index
    %c0_16 = arith.constant 0 : index
    %26 = vector.load %arg7[%c0_15, %c0_16] : memref<1x128xf32, #tpu.memory_space<vmem>>, vector<1x128xf32>
    %27 = vector.broadcast %26 : vector<1x128xf32> to vector<16x128xf32>
    %28 = arith.addf %25, %27 : vector<16x128xf32>
    %c0_17 = arith.constant 0 : index
    %c0_18 = arith.constant 0 : index
    %29 = vector.load %arg8[%c0_17, %c0_18] : memref<16x128xf32, #tpu.memory_space<vmem>>, vector<16x128xf32>
    tpu.vector_store %arg8[%c0_17, %c0_18], %28 {strides = array<i32>} : memref<16x128xf32, #tpu.memory_space<vmem>>, vector<16x128xf32>,
    return
  }
  func.func @transform_0(%arg0: i32) -> (i32, i32) {
    %c0_i32 = arith.constant 0 : i32
    %c0_i32_0 = arith.constant 0 : i32
    return %arg0, %c0_i32 : i32, i32
  }
  func.func @transform_1(%arg0: i32) -> (i32, i32) {
    %c0_i32 = arith.constant 0 : i32
    %c0_i32_0 = arith.constant 0 : i32
    %c0_i32_1 = arith.constant 0 : i32
    return %c0_i32, %c0_i32_0 : i32, i32
  }
  func.func @transform_2(%arg0: i32) -> (i32, i32) {
    %c0_i32 = arith.constant 0 : i32
    %c0_i32_0 = arith.constant 0 : i32
    %c0_i32_1 = arith.constant 0 : i32
    return %c0_i32, %c0_i32_0 : i32, i32
  }
  func.func @transform_3(%arg0: i32) -> (i32, i32) {
    %c0_i32 = arith.constant 0 : i32
    %c0_i32_0 = arith.constant 0 : i32
    %c0_i32_1 = arith.constant 0 : i32
    return %c0_i32, %c0_i32_0 : i32, i32
  }
  func.func @transform_4(%arg0: i32) -> (i32, i32) {
    %c0_i32 = arith.constant 0 : i32
    %c0_i32_0 = arith.constant 0 : i32
    %c0_i32_1 = arith.constant 0 : i32
    return %c0_i32, %c0_i32_0 : i32, i32
  }
  func.func @transform_5(%arg0: i32) -> (i32, i32) {
    %c0_i32 = arith.constant 0 : i32
    %c0_i32_0 = arith.constant 0 : i32
    %c0_i32_1 = arith.constant 0 : i32
    return %c0_i32, %c0_i32_0 : i32, i32
  }
  func.func @transform_6(%arg0: i32) -> (i32, i32) {
    %c0_i32 = arith.constant 0 : i32
    %c0_i32_0 = arith.constant 0 : i32
    %c0_i32_1 = arith.constant 0 : i32
    return %c0_i32, %c0_i32_0 : i32, i32
  }
  func.func @transform_7(%arg0: i32) -> (i32, i32) {
    %c0_i32 = arith.constant 0 : i32
    %c0_i32_0 = arith.constant 0 : i32
    return %arg0, %c0_i32 : i32, i32
  }
}

</mosaic_0001>

<llo_original>
// kernel: tpu_custom_call.1
$region0: #{tpu_custom_call.1}
  #allocation0 [shape = 'u32[]', space=smem, size = 0x4, offset = 0x4, fixed_abs, tag = 'smem constant byte address 0x4 - core index']
  #allocation1 [shape = 'u32[72,128]{1,0:T(1,128)}', space=vmem, size = 0x9000, scoped, tag = 'internal scratch']
  %s0 = inlined_call_operand.hbm [shape: f32[16,128], index: 0, kind: input, shape index: {}]
  %s1 = inlined_call_operand.hbm [shape: bf16[128,128], index: 1, kind: input, shape index: {}]
  %s2 = inlined_call_operand.hbm [shape: bf16[128,128], index: 2, kind: input, shape index: {}]
  %s3 = inlined_call_operand.hbm [shape: bf16[128,128], index: 3, kind: input, shape index: {}]
  %s4 = inlined_call_operand.vmem [shape: f32[1,128], index: 4, kind: input, shape index: {}]
  %s5 = inlined_call_operand.vmem [shape: f32[1,128], index: 5, kind: input, shape index: {}]
  %s6 = inlined_call_operand.vmem [shape: f32[1,128], index: 6, kind: input, shape index: {}]
  %s7 = inlined_call_operand.hbm [shape: f32[16,128], index: 7, kind: output, shape index: {}]
  %s8 = sld [smem:[#allocation0]]
  $region54: #{tpu_custom_call.1} parent=0
    _
  %s10 = ssub.s32 1, %s8
  %s11 = scalar_select 0, %s10, %s8
  $region1: #{tpu_custom_call.1} parent=0
    #allocation2 [shape = 'u8[8192]{0}', space=vmem, size = 0x2000, scoped, tag = 'input window, operand 0, single buffered']
    #allocation3 [shape = 's32[1]{0}', space=sflag, size = 0x4, scoped, tag = 'scoped memory for tpu_custom_call.1']
    #allocation4 [shape = 's32[1]{0}', space=sflag, size = 0x4, scoped, tag = 'scoped memory for tpu_custom_call.1']
    #allocation5 [shape = 'u8[32768]{0}', space=vmem, size = 0x8000, scoped, tag = 'input window, operand 1, single buffered']
    #allocation6 [shape = 's32[1]{0}', space=sflag, size = 0x4, scoped, tag = 'scoped memory for tpu_custom_call.1']
    #allocation7 [shape = 'u8[32768]{0}', space=vmem, size = 0x8000, scoped, tag = 'input window, operand 2, single buffered']
    #allocation8 [shape = 'u8[32768]{0}', space=vmem, size = 0x8000, scoped, tag = 'input window, operand 3, single buffered']
    #allocation9 [shape = 's32[1]{0}', space=sflag, size = 0x4, scoped, tag = 'scoped memory for tpu_custom_call.1']
    #allocation10 [shape = 'u8[8192]{0}', space=vmem, size = 0x2000, scoped, tag = 'output window, operand 0, single buffered']
    %12 = vsyncpa [#allocation3], 0
    %13 = vsyncpa [#allocation6], 0
    %14 = vsyncpa [#allocation9], 0
    %15 = vsyncpa [#allocation4], 0
    // Predicated region
    $region2: #{tpu_custom_call.1} parent=1 // pred_check
      _
    $region3: #{tpu_custom_call.1} parent=1 // pred_check_branch
      %17 = sbr.rel (0) target = $region5
    $region4: #{tpu_custom_call.1} parent=1 // pred_region
      %19 = vsyncadd [#allocation3], 0
      %s20 = sshll.u32 %s0, 4
      %s21 = int_to_ptr.hbm [resolvable:$true] %s20
      %s22 = sshll.u32 [#allocation2], 4
      %s23 = int_to_ptr.vmem [resolvable:$true] %s22
      %28 = dma.hbm_to_vmem [thread:$0]  %s21, 256, %s23, [#allocation3], 128, 128, 8
    $region5: #{tpu_custom_call.1} parent=1 // pred_fallthru
      _
    // Predicated region
    $region6: #{tpu_custom_call.1} parent=1 // pred_check
      _
    $region7: #{tpu_custom_call.1} parent=1 // pred_check_branch
      %30 = sbr.rel (0) target = $region9
    $region8: #{tpu_custom_call.1} parent=1 // pred_region
      %32 = vsyncadd [#allocation6], 0
      %s33 = sshll.u32 %s1, 4
      %s34 = int_to_ptr.hbm [resolvable:$true] %s33
      %s35 = sshll.u32 [#allocation5], 4
      %s36 = int_to_ptr.vmem [resolvable:$true] %s35
      %41 = dma.hbm_to_vmem [thread:$0]  %s34, 1024, %s36, [#allocation6], 64, 64, 4
    $region9: #{tpu_custom_call.1} parent=1 // pred_fallthru
      _
    // Predicated region
    $region10: #{tpu_custom_call.1} parent=1 // pred_check
      _
    $region11: #{tpu_custom_call.1} parent=1 // pred_check_branch
      %43 = sbr.rel (0) target = $region13
    $region12: #{tpu_custom_call.1} parent=1 // pred_region
      %45 = vsyncadd [#allocation6], 0
      %s46 = sshll.u32 %s2, 4
      %s47 = int_to_ptr.hbm [resolvable:$true] %s46
      %s48 = sshll.u32 [#allocation7], 4
      %s49 = int_to_ptr.vmem [resolvable:$true] %s48
      %54 = dma.hbm_to_vmem [thread:$0]  %s47, 1024, %s49, [#allocation6], 64, 64, 4
    $region13: #{tpu_custom_call.1} parent=1 // pred_fallthru
      _
    // Predicated region
    $region14: #{tpu_custom_call.1} parent=1 // pred_check
      _
    $region15: #{tpu_custom_call.1} parent=1 // pred_check_branch
      %56 = sbr.rel (0) target = $region17
    $region16: #{tpu_custom_call.1} parent=1 // pred_region
      %58 = vsyncadd [#allocation9], 0
      %s59 = sshll.u32 %s3, 4
      %s60 = int_to_ptr.hbm [resolvable:$true] %s59
      %s61 = sshll.u32 [#allocation8], 4
      %s62 = int_to_ptr.vmem [resolvable:$true] %s61
      %67 = dma.hbm_to_vmem [thread:$0]  %s60, 1024, %s62, [#allocation9], 64, 64, 4
    $region17: #{tpu_custom_call.1} parent=1 // pred_fallthru
      _
    // Predicated region
    $region18: #{tpu_custom_call.1} parent=1 // pred_check
      _
    $region19: #{tpu_custom_call.1} parent=1 // pred_check_branch
      %69 = sbr.rel (0) target = $region21
    $region20: #{tpu_custom_call.1} parent=1 // pred_region
      _
    $region21: #{tpu_custom_call.1} parent=1 // pred_fallthru
      _
    // Predicated region
    $region22: #{tpu_custom_call.1} parent=1 // pred_check
      _
    $region23: #{tpu_custom_call.1} parent=1 // pred_check_branch
      %71 = sbr.rel (0) target = $region25
    $region24: #{tpu_custom_call.1} parent=1 // pred_region
      _
    $region25: #{tpu_custom_call.1} parent=1 // pred_fallthru
      _
    // Predicated region
    $region26: #{tpu_custom_call.1} parent=1 // pred_check
      _
    $region27: #{tpu_custom_call.1} parent=1 // pred_check_branch
      %73 = sbr.rel (0) target = $region29
    $region28: #{tpu_custom_call.1} parent=1 // pred_region
      _
    $region29: #{tpu_custom_call.1} parent=1 // pred_fallthru
      _
    // Predicated region
    $region30: #{tpu_custom_call.1} parent=1 // pred_check
      _
    $region31: #{tpu_custom_call.1} parent=1 // pred_check_branch
      %75 = sbr.rel (0) target = $region33
    $region32: #{tpu_custom_call.1} parent=1 // pred_region
      %77 = dma.done [#allocation3], 256
    $region33: #{tpu_custom_call.1} parent=1 // pred_fallthru
      _
    // Predicated region
    $region34: #{tpu_custom_call.1} parent=1 // pred_check
      _
    $region35: #{tpu_custom_call.1} parent=1 // pred_check_branch
      %79 = sbr.rel (0) target = $region37
    $region36: #{tpu_custom_call.1} parent=1 // pred_region
      %81 = dma.done [#allocation6], 1024
    $region37: #{tpu_custom_call.1} parent=1 // pred_fallthru
      _
    // Predicated region
    $region38: #{tpu_custom_call.1} parent=1 // pred_check
      _
    $region39: #{tpu_custom_call.1} parent=1 // pred_check_branch
      %83 = sbr.rel (0) target = $region41
    $region40: #{tpu_custom_call.1} parent=1 // pred_region
      %85 = dma.done [#allocation6], 1024
    $region41: #{tpu_custom_call.1} parent=1 // pred_fallthru
      _
    // Predicated region
    $region42: #{tpu_custom_call.1} parent=1 // pred_check
      _
    $region43: #{tpu_custom_call.1} parent=1 // pred_check_branch
      %87 = sbr.rel (0) target = $region45
    $region44: #{tpu_custom_call.1} parent=1 // pred_region
      %89 = dma.done [#allocation9], 1024
    $region45: #{tpu_custom_call.1} parent=1 // pred_fallthru
      _
    %v90 = vld [vmem:[#allocation2] sm:$0xff]
    %v91 = vld [vmem:[#allocation2 + $0x8] sm:$0xff]
    %v92 = vpack.c.bf16 %v91, %v90
    %v93 = vld [vmem:[#allocation5] sm:$0xf]
    %v94 = vld [vmem:[#allocation5 + $0x4] sm:$0xf]
    %v95 = vld [vmem:[#allocation5 + $0x8] sm:$0xf]
    %v96 = vld [vmem:[#allocation5 + $0xc] sm:$0xf]
    %v97 = vld [vmem:[#allocation5 + $0x10] sm:$0xf]
    %v98 = vld [vmem:[#allocation5 + $0x14] sm:$0xf]
    %v99 = vld [vmem:[#allocation5 + $0x18] sm:$0xf]
    %v100 = vld [vmem:[#allocation5 + $0x1c] sm:$0xf]
    %v101 = vld [vmem:[#allocation5 + $0x20] sm:$0xf]
    %v102 = vld [vmem:[#allocation5 + $0x24] sm:$0xf]
    %v103 = vld [vmem:[#allocation5 + $0x28] sm:$0xf]
    %v104 = vld [vmem:[#allocation5 + $0x2c] sm:$0xf]
    %v105 = vld [vmem:[#allocation5 + $0x30] sm:$0xf]
    %v106 = vld [vmem:[#allocation5 + $0x34] sm:$0xf]
    %v107 = vld [vmem:[#allocation5 + $0x38] sm:$0xf]
    %v108 = vld [vmem:[#allocation5 + $0x3c] sm:$0xf]
    %v109 = vld [vmem:[%s4] sm:$0x1]
    %v111 = vperm.slane %v109, 0
    %v129 = vunpack.c.l.b16 %v93
    %v130 = vunpack.c.l.b16 %v94
    %v131 = vunpack.c.l.b16 %v95
    %v132 = vunpack.c.l.b16 %v96
    %v133 = vunpack.c.l.b16 %v97
    %v134 = vunpack.c.l.b16 %v98
    %v135 = vunpack.c.l.b16 %v99
    %v136 = vunpack.c.l.b16 %v100
    %v137 = vunpack.c.l.b16 %v101
    %v138 = vunpack.c.l.b16 %v102
    %v139 = vunpack.c.l.b16 %v103
    %v140 = vunpack.c.l.b16 %v104
    %v141 = vunpack.c.l.b16 %v105
    %v142 = vunpack.c.l.b16 %v106
    %v143 = vunpack.c.l.b16 %v107
    %v144 = vunpack.c.l.b16 %v108
    %v145 = vpack.c.b16 %v130, %v129
    %v146 = vpack.c.b16 %v132, %v131
    %v147 = vpack.c.b16 %v134, %v133
    %v148 = vpack.c.b16 %v136, %v135
    %v149 = vpack.c.b16 %v138, %v137
    %v150 = vpack.c.b16 %v140, %v139
    %v151 = vpack.c.b16 %v142, %v141
    %v152 = vpack.c.b16 %v144, %v143
    %161 = vmatpush.bf16.msra.mxu0 %v152
    %162 = vmatpush.bf16.msra.mxu0 %v151
    %163 = vmatpush.bf16.msra.mxu0 %v150
    %164 = vmatpush.bf16.msra.mxu0 %v149
    %165 = vmatpush.bf16.msra.mxu0 %v148
    %166 = vmatpush.bf16.msra.mxu0 %v147
    %167 = vmatpush.bf16.msra.mxu0 %v146
    %168 = vmatpush.bf16.msra.mxu0 %v145
    %169 = vmatmul.bf16.gmra.mxu0 %v92
    %v170 = vpop.f32.mrf.mxu0
    %v171 = vadd.f32 %v111, %v170
    %v172 = vpop.f32.mrf.mxu0
    %v173 = vadd.f32 %v111, %v172
    %174 = vdwg.mxu0
    %v175 = vxor.u32 %v171, 2147483648
    %v176 = vxor.u32 %v173, 2147483648
    %v177 = vmul.f32 %v175, 1.442695
    %v178 = vpow.pop %v177
    %v179 = vmul.f32 %v176, 1.442695
    %v180 = vpow.pop %v179
    %v181 = vadd.f32 %v178, 1.0
    %v182 = vadd.f32 %v180, 1.0
    %v183 = vrcp.pop %v181
    %v184 = vmul.f32 %v181, %v183
    %v185 = vsub.f32 1.0, %v184
    %v186 = vmul.f32 %v183, %v185
    %v187 = vadd.f32 %v183, %v186
    %vm188 = vweird.f32 %v181
    %vm189 = vweird.f32 %v183
    %vm190 = vmor %vm188, %vm189
    %v191 = vsel %vm190, %v183, %v187
    %v192 = vand.u32 2147483647, %v181
    %vm193 = vcmp.eq.f32.partialorder %v192, 8.507059e+37
    %v194 = vand.u32 %v181, 2147483648
    %v195 = vor.u32 1.1754944e-38, %v194
    %v196 = vsel %vm193, %v195, %v191
    %v197 = vmul.f32 1.0, %v196
    %v198 = vrcp.pop %v182
    %v199 = vmul.f32 %v182, %v198
    %v200 = vsub.f32 1.0, %v199
    %v201 = vmul.f32 %v198, %v200
    %v202 = vadd.f32 %v198, %v201
    %vm203 = vweird.f32 %v182
    %vm204 = vweird.f32 %v198
    %vm205 = vmor %vm203, %vm204
    %v206 = vsel %vm205, %v198, %v202
    %v207 = vand.u32 2147483647, %v182
    %vm208 = vcmp.eq.f32.partialorder %v207, 8.507059e+37
    %v209 = vand.u32 %v182, 2147483648
    %v210 = vor.u32 1.1754944e-38, %v209
    %v211 = vsel %vm208, %v210, %v206
    %v212 = vmul.f32 1.0, %v211
    %v213 = vpack.c.bf16 %v212, %v197
    %v214 = vld [vmem:[#allocation7] sm:$0xf]
    %v215 = vld [vmem:[#allocation7 + $0x4] sm:$0xf]
    %v216 = vld [vmem:[#allocation7 + $0x8] sm:$0xf]
    %v217 = vld [vmem:[#allocation7 + $0xc] sm:$0xf]
    %v218 = vld [vmem:[#allocation7 + $0x10] sm:$0xf]
    %v219 = vld [vmem:[#allocation7 + $0x14] sm:$0xf]
    %v220 = vld [vmem:[#allocation7 + $0x18] sm:$0xf]
    %v221 = vld [vmem:[#allocation7 + $0x1c] sm:$0xf]
    %v222 = vld [vmem:[#allocation7 + $0x20] sm:$0xf]
    %v223 = vld [vmem:[#allocation7 + $0x24] sm:$0xf]
    %v224 = vld [vmem:[#allocation7 + $0x28] sm:$0xf]
    %v225 = vld [vmem:[#allocation7 + $0x2c] sm:$0xf]
    %v226 = vld [vmem:[#allocation7 + $0x30] sm:$0xf]
    %v227 = vld [vmem:[#allocation7 + $0x34] sm:$0xf]
    %v228 = vld [vmem:[#allocation7 + $0x38] sm:$0xf]
    %v229 = vld [vmem:[#allocation7 + $0x3c] sm:$0xf]
    %v230 = vld [vmem:[%s5] sm:$0x1]
    %v232 = vperm.slane %v230, 0
    %v250 = vunpack.c.l.b16 %v214
    %v251 = vunpack.c.l.b16 %v215
    %v252 = vunpack.c.l.b16 %v216
    %v253 = vunpack.c.l.b16 %v217
    %v254 = vunpack.c.l.b16 %v218
    %v255 = vunpack.c.l.b16 %v219
    %v256 = vunpack.c.l.b16 %v220
    %v257 = vunpack.c.l.b16 %v221
    %v258 = vunpack.c.l.b16 %v222
    %v259 = vunpack.c.l.b16 %v223
    %v260 = vunpack.c.l.b16 %v224
    %v261 = vunpack.c.l.b16 %v225
    %v262 = vunpack.c.l.b16 %v226
    %v263 = vunpack.c.l.b16 %v227
    %v264 = vunpack.c.l.b16 %v228
    %v265 = vunpack.c.l.b16 %v229
    %v266 = vpack.c.b16 %v251, %v250
    %v267 = vpack.c.b16 %v253, %v252
    %v268 = vpack.c.b16 %v255, %v254
    %v269 = vpack.c.b16 %v257, %v256
    %v270 = vpack.c.b16 %v259, %v258
    %v271 = vpack.c.b16 %v261, %v260
    %v272 = vpack.c.b16 %v263, %v262
    %v273 = vpack.c.b16 %v265, %v264
    %282 = vmatpush.bf16.msra.mxu0 %v273
    %283 = vmatpush.bf16.msra.mxu0 %v272
    %284 = vmatpush.bf16.msra.mxu0 %v271
    %285 = vmatpush.bf16.msra.mxu0 %v270
    %286 = vmatpush.bf16.msra.mxu0 %v269
    %287 = vmatpush.bf16.msra.mxu0 %v268
    %288 = vmatpush.bf16.msra.mxu0 %v267
    %289 = vmatpush.bf16.msra.mxu0 %v266
    %290 = vmatmul.bf16.gmra.mxu0 %v213
    %v291 = vpop.f32.mrf.mxu0
    %v292 = vadd.f32 %v232, %v291
    %v293 = vpop.f32.mrf.mxu0
    %v294 = vadd.f32 %v232, %v293
    %295 = vdwg.mxu0
    %v296 = vxor.u32 %v292, 2147483648
    %v297 = vxor.u32 %v294, 2147483648
    %v298 = vmul.f32 %v296, 1.442695
    %v299 = vpow.pop %v298
    %v300 = vmul.f32 %v297, 1.442695
    %v301 = vpow.pop %v300
    %v302 = vadd.f32 %v299, 1.0
    %v303 = vadd.f32 %v301, 1.0
    %v304 = vrcp.pop %v302
    %v305 = vmul.f32 %v302, %v304
    %v306 = vsub.f32 1.0, %v305
    %v307 = vmul.f32 %v304, %v306
    %v308 = vadd.f32 %v304, %v307
    %vm309 = vweird.f32 %v302
    %vm310 = vweird.f32 %v304
    %vm311 = vmor %vm309, %vm310
    %v312 = vsel %vm311, %v304, %v308
    %v313 = vand.u32 2147483647, %v302
    %vm314 = vcmp.eq.f32.partialorder %v313, 8.507059e+37
    %v315 = vand.u32 %v302, 2147483648
    %v316 = vor.u32 1.1754944e-38, %v315
    %v317 = vsel %vm314, %v316, %v312
    %v318 = vmul.f32 1.0, %v317
    %v319 = vrcp.pop %v303
    %v320 = vmul.f32 %v303, %v319
    %v321 = vsub.f32 1.0, %v320
    %v322 = vmul.f32 %v319, %v321
    %v323 = vadd.f32 %v319, %v322
    %vm324 = vweird.f32 %v303
    %vm325 = vweird.f32 %v319
    %vm326 = vmor %vm324, %vm325
    %v327 = vsel %vm326, %v319, %v323
    %v328 = vand.u32 2147483647, %v303
    %vm329 = vcmp.eq.f32.partialorder %v328, 8.507059e+37
    %v330 = vand.u32 %v303, 2147483648
    %v331 = vor.u32 1.1754944e-38, %v330
    %v332 = vsel %vm329, %v331, %v327
    %v333 = vmul.f32 1.0, %v332
    %v334 = vpack.c.bf16 %v333, %v318
    %v335 = vld [vmem:[#allocation8] sm:$0xf]
    %v336 = vld [vmem:[#allocation8 + $0x4] sm:$0xf]
    %v337 = vld [vmem:[#allocation8 + $0x8] sm:$0xf]
    %v338 = vld [vmem:[#allocation8 + $0xc] sm:$0xf]
    %v339 = vld [vmem:[#allocation8 + $0x10] sm:$0xf]
    %v340 = vld [vmem:[#allocation8 + $0x14] sm:$0xf]
    %v341 = vld [vmem:[#allocation8 + $0x18] sm:$0xf]
    %v342 = vld [vmem:[#allocation8 + $0x1c] sm:$0xf]
    %v343 = vld [vmem:[#allocation8 + $0x20] sm:$0xf]
    %v344 = vld [vmem:[#allocation8 + $0x24] sm:$0xf]
    %v345 = vld [vmem:[#allocation8 + $0x28] sm:$0xf]
    %v346 = vld [vmem:[#allocation8 + $0x2c] sm:$0xf]
    %v347 = vld [vmem:[#allocation8 + $0x30] sm:$0xf]
    %v348 = vld [vmem:[#allocation8 + $0x34] sm:$0xf]
    %v349 = vld [vmem:[#allocation8 + $0x38] sm:$0xf]
    %v350 = vld [vmem:[#allocation8 + $0x3c] sm:$0xf]
    %v351 = vld [vmem:[%s6] sm:$0x1]
    %v353 = vperm.slane %v351, 0
    %v371 = vunpack.c.l.b16 %v335
    %v372 = vunpack.c.l.b16 %v336
    %v373 = vunpack.c.l.b16 %v337
    %v374 = vunpack.c.l.b16 %v338
    %v375 = vunpack.c.l.b16 %v339
    %v376 = vunpack.c.l.b16 %v340
    %v377 = vunpack.c.l.b16 %v341
    %v378 = vunpack.c.l.b16 %v342
    %v379 = vunpack.c.l.b16 %v343
    %v380 = vunpack.c.l.b16 %v344
    %v381 = vunpack.c.l.b16 %v345
    %v382 = vunpack.c.l.b16 %v346
    %v383 = vunpack.c.l.b16 %v347
    %v384 = vunpack.c.l.b16 %v348
    %v385 = vunpack.c.l.b16 %v349
    %v386 = vunpack.c.l.b16 %v350
    %v387 = vpack.c.b16 %v372, %v371
    %v388 = vpack.c.b16 %v374, %v373
    %v389 = vpack.c.b16 %v376, %v375
    %v390 = vpack.c.b16 %v378, %v377
    %v391 = vpack.c.b16 %v380, %v379
    %v392 = vpack.c.b16 %v382, %v381
    %v393 = vpack.c.b16 %v384, %v383
    %v394 = vpack.c.b16 %v386, %v385
    %403 = vmatpush.bf16.msra.mxu0 %v394
    %404 = vmatpush.bf16.msra.mxu0 %v393
    %405 = vmatpush.bf16.msra.mxu0 %v392
    %406 = vmatpush.bf16.msra.mxu0 %v391
    %407 = vmatpush.bf16.msra.mxu0 %v390
    %408 = vmatpush.bf16.msra.mxu0 %v389
    %409 = vmatpush.bf16.msra.mxu0 %v388
    %410 = vmatpush.bf16.msra.mxu0 %v387
    %411 = vmatmul.bf16.gmra.mxu0 %v334
    %v412 = vpop.f32.mrf.mxu0
    %v413 = vadd.f32 %v353, %v412
    %v414 = vpop.f32.mrf.mxu0
    %v415 = vadd.f32 %v353, %v414
    %416 = vdwg.mxu0
    %417 = vst [vmem:[#allocation10] sm:$0xff] %v413
    %418 = vst [vmem:[#allocation10 + $0x8] sm:$0xff] %v415
    // Predicated region
    $region46: #{tpu_custom_call.1} parent=1 // pred_check
      _
    $region47: #{tpu_custom_call.1} parent=1 // pred_check_branch
      %420 = sbr.rel (0) target = $region49
    $region48: #{tpu_custom_call.1} parent=1 // pred_region
      %422 = vsyncadd [#allocation4], 0
      %s423 = sshll.u32 [#allocation10], 4
      %s424 = int_to_ptr.vmem [resolvable:$true] %s423
      %s425 = sshll.u32 %s7, 4
      %s426 = int_to_ptr.hbm [resolvable:$true] %s425
      %431 = dma.vmem_to_hbm [thread:$0]  %s424, 256, %s426, [#allocation4], 128, 128, 8
    $region49: #{tpu_custom_call.1} parent=1 // pred_fallthru
      _
    // Predicated region
    $region50: #{tpu_custom_call.1} parent=1 // pred_check
      _
    $region51: #{tpu_custom_call.1} parent=1 // pred_check_branch
      %433 = sbr.rel (0) target = $region53
    $region52: #{tpu_custom_call.1} parent=1 // pred_region
      %435 = dma.done [#allocation4], 256
    $region53: #{tpu_custom_call.1} parent=1 // pred_fallthru
      _
    %436 = vsyncpa [#allocation3], 1
    %437 = vsyncpa [#allocation6], 1
    %438 = vsyncpa [#allocation9], 1
    %439 = vsyncpa [#allocation4], 1

</llo_original>
